<compile_context>
chip_gen: v5e
topology: v5e:2x2
jax: 0.10.0
libtpu: 0.0.40
codegen_flags: <defaults>
</compile_context>

<pallas_src>
import math
import functools

import jax
import jax.numpy as jnp
from jax import lax
from jax.experimental import pallas as pl
from jax.experimental.pallas import tpu as pltpu


# ---------------------------- fused sequence kernel ----------------------------
#
# Parameter slab layout (rows, width F, all f32):
#   [0*F : 1*F)  W_ir^T      [3*F : 4*F)  W_hr^T      [6*F : 7*F)  h0 (initial GCN weight)
#   [1*F : 2*F)  W_iz^T      [4*F : 5*F)  W_hz^T      row 7*F+0    b_ir + b_hr
#   [2*F : 3*F)  W_in^T      [5*F : 6*F)  W_hn^T      row 7*F+1    b_iz + b_hz
#                                                     row 7*F+2    b_in
#                                                     row 7*F+3    b_hn
#                                                     row 7*F+4    linear weight (1,F)
#   (zero padding to a multiple of 8 rows)

def _evolvegcnh_seq_kernel(f,
                           xt_ref,    # VMEM (1, F, F)  X_tilde_t (gathered+scaled in wrapper)
                           ax_ref,    # VMEM (1, N, F)  (A_norm @ X_t)
                           slab_ref,  # VMEM (rows, F)  coalesced parameters (resident)
                           y_ref,     # VMEM (1, 1, N)  lane-dense per-step output
                           w_scr):    # VMEM (F, F)     evolved weight / GRU hidden (carried)
    t = pl.program_id(0)

    @pl.when(t == 0)
    def _():
        w_scr[...] = slab_ref[pl.ds(6 * f, f), :]          # hidden <- initial weight

    x_t = xt_ref[0]                                        # (F, F)
    h_prev = w_scr[...]                                    # (F, F)

    def wblk(i):                                           # static, sublane-aligned slice
        return slab_ref[pl.ds(i * f, f), :]

    # ---- GRU step: 6 tiny lane-aligned MXU matmuls, gates r/z/n (torch order) ----
    gi_r = jnp.dot(x_t, wblk(0), preferred_element_type=jnp.float32)
    gi_z = jnp.dot(x_t, wblk(1), preferred_element_type=jnp.float32)
    gi_n = jnp.dot(x_t, wblk(2), preferred_element_type=jnp.float32)
    gh_r = jnp.dot(h_prev, wblk(3), preferred_element_type=jnp.float32)
    gh_z = jnp.dot(h_prev, wblk(4), preferred_element_type=jnp.float32)
    gh_n = jnp.dot(h_prev, wblk(5), preferred_element_type=jnp.float32)

    b_r  = slab_ref[pl.ds(7 * f + 0, 1), :]                # b_ir + b_hr  (1, F)
    b_z  = slab_ref[pl.ds(7 * f + 1, 1), :]                # b_iz + b_hz
    b_in = slab_ref[pl.ds(7 * f + 2, 1), :]
    b_hn = slab_ref[pl.ds(7 * f + 3, 1), :]
    lw   = slab_ref[pl.ds(7 * f + 4, 1), :]                # Linear(F,1).weight  (1, F)

    r = jax.nn.sigmoid(gi_r + gh_r + b_r)
    z = jax.nn.sigmoid(gi_z + gh_z + b_z)
    n = jnp.tanh(gi_n + b_in + r * (gh_n + b_hn))
    w_new = (1.0 - z) * n + z * h_prev                     # evolved GCN weight (F, F)
    w_scr[...] = w_new                                     # carry to next grid step

    # ---- GCN (re-associated): H = (A_norm X) @ W', then ReLU + Linear head ----
    h = jnp.dot(ax_ref[0], w_new, preferred_element_type=jnp.float32)   # (N, F)
    h = jnp.maximum(h, 0.0)
    # lane-dense output: y[0, n] = sum_f relu(H)[n, f] * lw[f]  ->  (1, N)
    y = lax.dot_general(lw, h, (((1,), (1,)), ((), ())),
                        preferred_element_type=jnp.float32)
    y_ref[0] = y


def evolvegcnh_seq_pallas(x_tilde, ax, slab):
    """x_tilde: (T, F, F), ax: (T, N, F), slab: (rows, F). Returns (T, 1, N)."""
    t_steps, f, _ = x_tilde.shape
    _, n, _ = ax.shape
    rows = slab.shape[0]
    kernel = functools.partial(_evolvegcnh_seq_kernel, f)
    return pl.pallas_call(
        kernel,
        out_shape=jax.ShapeDtypeStruct((t_steps, 1, n), jnp.float32),
        grid_spec=pltpu.PrefetchScalarGridSpec(
            num_scalar_prefetch=0,
            grid=(t_steps,),
            in_specs=[
                pl.BlockSpec((1, f, f), lambda t: (t, 0, 0)),   # X_tilde_t
                pl.BlockSpec((1, n, f), lambda t: (t, 0, 0)),   # (A X)_t
                pl.BlockSpec((rows, f), lambda t: (0, 0)),      # params: resident, DMA'd once
            ],
            out_specs=pl.BlockSpec((1, 1, n), lambda t: (t, 0, 0)),
            scratch_shapes=[pltpu.VMEM((f, f), jnp.float32)],   # GRU hidden, carried over t
        ),
        compiler_params=pltpu.CompilerParams(
            dimension_semantics=("arbitrary",)),                # sequential recurrence
    )(x_tilde, ax, slab)


# ---------------------------- parameter packing & JAX glue ----------------------------

def pack_param_slab(w_ih, w_hh, b_ih, b_hh, init_w, lin_w):
    f = init_w.shape[0]
    blocks = [
        w_ih[0:f].T, w_ih[f:2 * f].T, w_ih[2 * f:3 * f].T,       # W_ir^T, W_iz^T, W_in^T
        w_hh[0:f].T, w_hh[f:2 * f].T, w_hh[2 * f:3 * f].T,       # W_hr^T, W_hz^T, W_hn^T
        init_w,                                                  # h0
        (b_ih[0:f] + b_hh[0:f]).reshape(1, f),                   # b_ir + b_hr
        (b_ih[f:2 * f] + b_hh[f:2 * f]).reshape(1, f),           # b_iz + b_hz
        b_ih[2 * f:3 * f].reshape(1, f),                         # b_in
        b_hh[2 * f:3 * f].reshape(1, f),                         # b_hn
        lin_w.reshape(1, f),                                     # Linear(F,1).weight
    ]
    slab = jnp.concatenate(blocks, axis=0).astype(jnp.float32)   # (7F + 5, F)
    pad = (-slab.shape[0]) % 8
    if pad:
        slab = jnp.concatenate([slab, jnp.zeros((pad, f), jnp.float32)], axis=0)
    return slab


def build_norm_adj(edge_index, edge_weight, n):
    """gcn_norm: add self-loops (weight 1), D^-1/2 (A+I) D^-1/2, dense (N, N).
    Topology is static -> build ONCE and reuse across steps."""
    src, dst = edge_index[0], edge_index[1]
    loop = jnp.arange(n, dtype=src.dtype)
    src = jnp.concatenate([src, loop])
    dst = jnp.concatenate([dst, loop])
    w = jnp.concatenate([edge_weight, jnp.ones((n,), jnp.float32)])
    deg = jnp.zeros((n,), jnp.float32).at[dst].add(w)
    dinv = jnp.where(deg > 0, 1.0 / jnp.sqrt(deg), 0.0)
    norm = dinv[src] * w * dinv[dst]
    return jnp.zeros((n, n), jnp.float32).at[dst, src].add(norm)


def init_params(key, n_nodes, n_feat):
    ks = jax.random.split(key, 8)
    s = 1.0 / math.sqrt(n_feat)
    u = lambda kk, shape: jax.random.uniform(kk, shape, jnp.float32, -s, s)
    pool_w = u(ks[0], (n_feat,))                 # TopKPooling weight (1, F) -> (F,)
    init_w = u(ks[1], (n_feat, n_feat))          # EvolveGCNH initial_weight
    w_ih = u(ks[2], (3 * n_feat, n_feat))        # GRU weight_ih_l0, gate order [r; z; n]
    w_hh = u(ks[3], (3 * n_feat, n_feat))        # GRU weight_hh_l0
    b_ih = u(ks[4], (3 * n_feat,))
    b_hh = u(ks[5], (3 * n_feat,))
    lin_w = u(ks[6], (1, n_feat))                # Linear(F, 1).weight
    lin_b = u(ks[7], (1,))
    raw = dict(pool_w=pool_w, init_w=init_w, w_ih=w_ih, w_hh=w_hh,
               b_ih=b_ih, b_hh=b_hh, lin_w=lin_w, lin_b=lin_b)
    return dict(
        pool_w=pool_w,
        slab=pack_param_slab(w_ih, w_hh, b_ih, b_hh, init_w, lin_w),
        lin_b=lin_b.reshape(1, 1),
        raw=raw,
    )


def recurrent_gcn_evolvegcnh_forward(params, xs, a_norm):
    """xs: (T, N, F) node-feature sequence. Returns (T, N, 1) — one output per time step,
    with the evolved GCN weight carried across steps (matches repeated calls of the
    stateful torch module)."""
    t_steps, n, f = xs.shape
    assert f <= n, "EvolveGCNH ratio F/N implies k == F; requires F <= N"

    # ---- TopKPooling (tiny, data-dependent sort -> XLA): score, top-k, gather + scale ----
    p = params["pool_w"]
    p_hat = p / jnp.maximum(jnp.linalg.norm(p), 1e-12)
    scores = jnp.tanh(xs @ p_hat)                               # (T, N)
    vals, perms = lax.top_k(scores, f)                          # (T, F) each; k == F
    x_tilde = jnp.take_along_axis(xs, perms[..., None], axis=1) * vals[..., None]  # (T,F,F)

    # ---- associativity: A @ (X W') == (A X) @ W'  ->  precompute AX, drop A from kernel ----
    ax = jnp.einsum("nm,tmf->tnf", a_norm, xs)                  # (T, N, F)

    # ---- fused Pallas kernel: GRU weight evolution + GCN + ReLU + Linear, all T steps ----
    y = evolvegcnh_seq_pallas(x_tilde, ax, params["slab"])      # (T, 1, N)
    return jnp.transpose(y, (0, 2, 1)) + params["lin_b"]        # (T, N, 1)


def single_step_forward(params, x, a_norm):
    """Exact analogue of one torch forward call (fresh initial weight): (N, F) -> (N, 1)."""
    return recurrent_gcn_evolvegcnh_forward(params, x[None], a_norm)[0]


# ---------------------------- pure-JAX reference (correctness check) ----------------------------

def _reference_forward(raw, xs, a_norm):
    t_steps, n, f = xs.shape
    p_hat = raw["pool_w"] / jnp.maximum(jnp.linalg.norm(raw["pool_w"]), 1e-12)
    scores = jnp.tanh(xs @ p_hat)
    vals, perms = lax.top_k(scores, f)
    x_tilde_all = jnp.take_along_axis(xs, perms[..., None], axis=1) * vals[..., None]
    ax_all = jnp.einsum("nm,tmf->tnf", a_norm, xs)
    w = raw["init_w"]
    ys = []
    for t in range(t_steps):
        gi = x_tilde_all[t] @ raw["w_ih"].T + raw["b_ih"]
        gh = w @ raw["w_hh"].T + raw["b_hh"]
        r = jax.nn.sigmoid(gi[:, :f] + gh[:, :f])
        z = jax.nn.sigmoid(gi[:, f:2 * f] + gh[:, f:2 * f])
        nn_ = jnp.tanh(gi[:, 2 * f:] + r * gh[:, 2 * f:])
        w = (1.0 - z) * nn_ + z * w
        h = jnp.maximum(ax_all[t] @ w, 0.0)
        ys.append(h @ raw["lin_w"].T + raw["lin_b"].reshape(1, 1))
    return jnp.stack(ys)


if __name__ == "__main__":
    N, F_, T = 32, 8, 8                  # node_count=32, node_features=8, 8 time steps
    key = jax.random.PRNGKey(0)
    kx, kw, kp = jax.random.split(key, 3)

    xs = jax.random.normal(kx, (T, N, F_), jnp.float32)
    idx = jnp.arange(N, dtype=jnp.int32)
    src = jnp.concatenate([idx, (idx + 1) % N])
    dst = jnp.concatenate([(idx + 1) % N, idx])
    edge_index = jnp.stack([src, dst])                          # (2, 64) bidirectional ring
    edge_weight = 0.5 + jax.random.uniform(kw, (2 * N,), jnp.float32)

    params = init_params(kp, N, F_)
    # static topology: build the dense normalized adjacency once, reuse every step
    a_norm = jax.block_until_ready(build_norm_adj(edge_index, edge_weight, N))

    fwd = jax.jit(recurrent_gcn_evolvegcnh_forward)
    ys = jax.block_until_ready(fwd(params, xs, a_norm))
    assert ys.shape == (T, N, 1) and ys.dtype == jnp.float32

    y0 = jax.block_until_ready(jax.jit(single_step_forward)(params, xs[0], a_norm))
    assert y0.shape == (N, 1)

    y_ref = jax.block_until_ready(_reference_forward(params["raw"], xs, a_norm))
    err = float(jnp.max(jnp.abs(ys - y_ref) / (1.0 + jnp.abs(y_ref))))
    assert err < 5e-2, f"mismatch vs pure-JAX reference: {err}"

    print("KERNEL_OK")
</pallas_src>

<mosaic_0001>
module attributes {stable_mosaic.version = 11 : i64} {
  func.func @_evolvegcnh_seq_kernel(%arg0: i32, %arg1: memref<1x8x8xf32, #tpu.memory_space<vmem>>, %arg2: memref<1x32x8xf32, #tpu.memory_space<vmem>>, %arg3: memref<64x8xf32, #tpu.memory_space<vmem>>, %arg4: memref<1x1x32xf32, #tpu.memory_space<vmem>>, %arg5: memref<8x8xf32, #tpu.memory_space<vmem>>) attributes {dimension_semantics = [#tpu.dimension_semantics<arbitrary>], iteration_bounds = array<i64: 8>, scalar_prefetch = 0 : i64, scratch_operands = 1 : i64, tpu.core_type = #tpu.core_type<tc>, window_params = [{transform_indices = @transform_0, window_bounds = array<i64: 1, 8, 8>}, {transform_indices = @transform_1, window_bounds = array<i64: 1, 32, 8>}, {pipeline_mode = #tpu.pipeline_mode<synchronous>, transform_indices = @transform_2, window_bounds = array<i64: 64, 8>}, {transform_indices = @transform_3, window_bounds = array<i64: 1, 1, 32>}]} {
    %c0_i32 = arith.constant 0 : i32
    %0 = arith.cmpi eq, %arg0, %c0_i32 : i32
    %1 = arith.extui %0 : i1 to i32
    %c0_i32_0 = arith.constant 0 : i32
    %2 = arith.cmpi ne, %1, %c0_i32_0 : i32
    scf.if %2 {
      %c48 = arith.constant 48 : index
      %c0_36 = arith.constant 0 : index
      %61 = vector.load %arg3[%c48, %c0_36] : memref<64x8xf32, #tpu.memory_space<vmem>>, vector<8x8xf32>
      %c0_37 = arith.constant 0 : index
      %c0_38 = arith.constant 0 : index
      %62 = vector.load %arg5[%c0_37, %c0_38] : memref<8x8xf32, #tpu.memory_space<vmem>>, vector<8x8xf32>
      tpu.vector_store %arg5[%c0_37, %c0_38], %61 {strides = array<i32>} : memref<8x8xf32, #tpu.memory_space<vmem>>, vector<8x8xf32>,
    } else {
    }
    %c0 = arith.constant 0 : index
    %c0_1 = arith.constant 0 : index
    %c0_2 = arith.constant 0 : index
    %3 = vector.load %arg1[%c0, %c0_1, %c0_2] : memref<1x8x8xf32, #tpu.memory_space<vmem>>, vector<1x8x8xf32>
    %4 = vector.shape_cast %3 : vector<1x8x8xf32> to vector<8x8xf32>
    %c0_3 = arith.constant 0 : index
    %c0_4 = arith.constant 0 : index
    %5 = vector.load %arg5[%c0_3, %c0_4] : memref<8x8xf32, #tpu.memory_space<vmem>>, vector<8x8xf32>
    %c0_5 = arith.constant 0 : index
    %c0_6 = arith.constant 0 : index
    %6 = vector.load %arg3[%c0_5, %c0_6] : memref<64x8xf32, #tpu.memory_space<vmem>>, vector<8x8xf32>
    %cst = arith.constant dense<0.000000e+00> : vector<8x8xf32>
    %7 = tpu.matmul %4, %6, %cst {dimension_numbers = #tpu.dot_dimension_numbers<[1], [0], [0], [1], [0, 0, 1, 1], [], []>} : vector<8x8xf32>, vector<8x8xf32>, vector<8x8xf32> -> vector<8x8xf32>
    %c8 = arith.constant 8 : index
    %c0_7 = arith.constant 0 : index
    %8 = vector.load %arg3[%c8, %c0_7] : memref<64x8xf32, #tpu.memory_space<vmem>>, vector<8x8xf32>
    %cst_8 = arith.constant dense<0.000000e+00> : vector<8x8xf32>
    %9 = tpu.matmul %4, %8, %cst_8 {dimension_numbers = #tpu.dot_dimension_numbers<[1], [0], [0], [1], [0, 0, 1, 1], [], []>} : vector<8x8xf32>, vector<8x8xf32>, vector<8x8xf32> -> vector<8x8xf32>
    %c16 = arith.constant 16 : index
    %c0_9 = arith.constant 0 : index
    %10 = vector.load %arg3[%c16, %c0_9] : memref<64x8xf32, #tpu.memory_space<vmem>>, vector<8x8xf32>
    %cst_10 = arith.constant dense<0.000000e+00> : vector<8x8xf32>
    %11 = tpu.matmul %4, %10, %cst_10 {dimension_numbers = #tpu.dot_dimension_numbers<[1], [0], [0], [1], [0, 0, 1, 1], [], []>} : vector<8x8xf32>, vector<8x8xf32>, vector<8x8xf32> -> vector<8x8xf32>
    %c24 = arith.constant 24 : index
    %c0_11 = arith.constant 0 : index
    %12 = vector.load %arg3[%c24, %c0_11] : memref<64x8xf32, #tpu.memory_space<vmem>>, vector<8x8xf32>
    %cst_12 = arith.constant dense<0.000000e+00> : vector<8x8xf32>
    %13 = tpu.matmul %5, %12, %cst_12 {dimension_numbers = #tpu.dot_dimension_numbers<[1], [0], [0], [1], [0, 0, 1, 1], [], []>} : vector<8x8xf32>, vector<8x8xf32>, vector<8x8xf32> -> vector<8x8xf32>
    %c32 = arith.constant 32 : index
    %c0_13 = arith.constant 0 : index
    %14 = vector.load %arg3[%c32, %c0_13] : memref<64x8xf32, #tpu.memory_space<vmem>>, vector<8x8xf32>
    %cst_14 = arith.constant dense<0.000000e+00> : vector<8x8xf32>
    %15 = tpu.matmul %5, %14, %cst_14 {dimension_numbers = #tpu.dot_dimension_numbers<[1], [0], [0], [1], [0, 0, 1, 1], [], []>} : vector<8x8xf32>, vector<8x8xf32>, vector<8x8xf32> -> vector<8x8xf32>
    %c40 = arith.constant 40 : index
    %c0_15 = arith.constant 0 : index
    %16 = vector.load %arg3[%c40, %c0_15] : memref<64x8xf32, #tpu.memory_space<vmem>>, vector<8x8xf32>
    %cst_16 = arith.constant dense<0.000000e+00> : vector<8x8xf32>
    %17 = tpu.matmul %5, %16, %cst_16 {dimension_numbers = #tpu.dot_dimension_numbers<[1], [0], [0], [1], [0, 0, 1, 1], [], []>} : vector<8x8xf32>, vector<8x8xf32>, vector<8x8xf32> -> vector<8x8xf32>
    %c56 = arith.constant 56 : index
    %c0_17 = arith.constant 0 : index
    %18 = vector.load %arg3[%c56, %c0_17] : memref<64x8xf32, #tpu.memory_space<vmem>>, vector<1x8xf32>
    %c57 = arith.constant 57 : index
    %c0_18 = arith.constant 0 : index
    %19 = vector.load %arg3[%c57, %c0_18] : memref<64x8xf32, #tpu.memory_space<vmem>>, vector<1x8xf32>
    %c58 = arith.constant 58 : index
    %c0_19 = arith.constant 0 : index
    %20 = vector.load %arg3[%c58, %c0_19] : memref<64x8xf32, #tpu.memory_space<vmem>>, vector<1x8xf32>
    %c59 = arith.constant 59 : index
    %c0_20 = arith.constant 0 : index
    %21 = vector.load %arg3[%c59, %c0_20] : memref<64x8xf32, #tpu.memory_space<vmem>>, vector<1x8xf32>
    %c60 = arith.constant 60 : index
    %c0_21 = arith.constant 0 : index
    %22 = vector.load %arg3[%c60, %c0_21] : memref<64x8xf32, #tpu.memory_space<vmem>>, vector<1x8xf32>
    %23 = arith.addf %7, %13 : vector<8x8xf32>
    %24 = vector.broadcast %18 : vector<1x8xf32> to vector<8x8xf32>
    %25 = arith.addf %23, %24 : vector<8x8xf32>
    %26 = arith.negf %25 : vector<8x8xf32>
    %27 = math.exp %26 : vector<8x8xf32>
    %cst_22 = arith.constant 1.000000e+00 : f32
    %28 = vector.broadcast %cst_22 : f32 to vector<8x8xf32>
    %29 = arith.addf %28, %27 : vector<8x8xf32>
    %30 = arith.divf %28, %29 : vector<8x8xf32>
    %31 = arith.addf %9, %15 : vector<8x8xf32>
    %32 = vector.broadcast %19 : vector<1x8xf32> to vector<8x8xf32>
    %33 = arith.addf %31, %32 : vector<8x8xf32>
    %34 = arith.negf %33 : vector<8x8xf32>
    %35 = math.exp %34 : vector<8x8xf32>
    %cst_23 = arith.constant 1.000000e+00 : f32
    %36 = vector.broadcast %cst_23 : f32 to vector<8x8xf32>
    %37 = arith.addf %36, %35 : vector<8x8xf32>
    %38 = arith.divf %36, %37 : vector<8x8xf32>
    %39 = vector.broadcast %20 : vector<1x8xf32> to vector<8x8xf32>
    %40 = arith.addf %11, %39 : vector<8x8xf32>
    %41 = vector.broadcast %21 : vector<1x8xf32> to vector<8x8xf32>
    %42 = arith.addf %17, %41 : vector<8x8xf32>
    %43 = arith.mulf %30, %42 : vector<8x8xf32>
    %44 = arith.addf %40, %43 : vector<8x8xf32>
    %45 = math.tanh %44 : vector<8x8xf32>
    %cst_24 = arith.constant 1.000000e+00 : f32
    %46 = vector.broadcast %cst_24 : f32 to vector<8x8xf32>
    %47 = arith.subf %46, %38 : vector<8x8xf32>
    %48 = arith.mulf %47, %45 : vector<8x8xf32>
    %49 = arith.mulf %38, %5 : vector<8x8xf32>
    %50 = arith.addf %48, %49 : vector<8x8xf32>
    %c0_25 = arith.constant 0 : index
    %c0_26 = arith.constant 0 : index
    %51 = vector.load %arg5[%c0_25, %c0_26] : memref<8x8xf32, #tpu.memory_space<vmem>>, vector<8x8xf32>
    tpu.vector_store %arg5[%c0_25, %c0_26], %50 {strides = array<i32>} : memref<8x8xf32, #tpu.memory_space<vmem>>, vector<8x8xf32>,
    %c0_27 = arith.constant 0 : index
    %c0_28 = arith.constant 0 : index
    %c0_29 = arith.constant 0 : index
    %52 = vector.load %arg2[%c0_27, %c0_28, %c0_29] : memref<1x32x8xf32, #tpu.memory_space<vmem>>, vector<1x32x8xf32>
    %53 = vector.shape_cast %52 : vector<1x32x8xf32> to vector<32x8xf32>
    %cst_30 = arith.constant dense<0.000000e+00> : vector<32x8xf32>
    %54 = tpu.matmul %53, %50, %cst_30 {dimension_numbers = #tpu.dot_dimension_numbers<[1], [0], [0], [1], [0, 0, 1, 1], [], []>} : vector<32x8xf32>, vector<8x8xf32>, vector<32x8xf32> -> vector<32x8xf32>
    %cst_31 = arith.constant 0.000000e+00 : f32
    %55 = vector.broadcast %cst_31 : f32 to vector<32x8xf32>
    %56 = arith.maximumf %54, %55 : vector<32x8xf32>
    %cst_32 = arith.constant dense<0.000000e+00> : vector<1x32xf32>
    %57 = tpu.matmul %22, %56, %cst_32 {dimension_numbers = #tpu.dot_dimension_numbers<[1], [1], [0], [0], [0, 0, 1, 0], [], []>} : vector<1x8xf32>, vector<32x8xf32>, vector<1x32xf32> -> vector<1x32xf32>
    %c0_33 = arith.constant 0 : index
    %c0_34 = arith.constant 0 : index
    %c0_35 = arith.constant 0 : index
    %58 = vector.load %arg4[%c0_33, %c0_34, %c0_35] : memref<1x1x32xf32, #tpu.memory_space<vmem>>, vector<1x1x32xf32>
    %59 = vector.shape_cast %58 : vector<1x1x32xf32> to vector<1x32xf32>
    %60 = vector.shape_cast %57 : vector<1x32xf32> to vector<1x1x32xf32>
    tpu.vector_store %arg4[%c0_33, %c0_34, %c0_35], %60 {strides = array<i32>} : memref<1x1x32xf32, #tpu.memory_space<vmem>>, vector<1x1x32xf32>,
    return
  }
  func.func @transform_0(%arg0: i32) -> (i32, i32, i32) {
    %c0_i32 = arith.constant 0 : i32
    %c0_i32_0 = arith.constant 0 : i32
    %c0_i32_1 = arith.constant 0 : i32
    return %arg0, %c0_i32, %c0_i32_0 : i32, i32, i32
  }
  func.func @transform_1(%arg0: i32) -> (i32, i32, i32) {
    %c0_i32 = arith.constant 0 : i32
    %c0_i32_0 = arith.constant 0 : i32
    %c0_i32_1 = arith.constant 0 : i32
    return %arg0, %c0_i32, %c0_i32_0 : i32, i32, i32
  }
  func.func @transform_2(%arg0: i32) -> (i32, i32) {
    %c0_i32 = arith.constant 0 : i32
    %c0_i32_0 = arith.constant 0 : i32
    %c0_i32_1 = arith.constant 0 : i32
    return %c0_i32, %c0_i32_0 : i32, i32
  }
  func.func @transform_3(%arg0: i32) -> (i32, i32, i32) {
    %c0_i32 = arith.constant 0 : i32
    %c0_i32_0 = arith.constant 0 : i32
    %c0_i32_1 = arith.constant 0 : i32
    return %arg0, %c0_i32, %c0_i32_0 : i32, i32, i32
  }
}

</mosaic_0001>

<llo_original>
// kernel: recurrent_gcn_evolvegcnh_forward.1
$region0: #{recurrent_gcn_evolvegcnh_forward.1}
  #allocation0 [shape = 'u32[]', space=smem, size = 0x4, offset = 0x4, fixed_abs, tag = 'smem constant byte address 0x4 - core index']
  #allocation1 [shape = 'u32[72,128]{1,0:T(1,128)}', space=vmem, size = 0x9000, scoped, tag = 'internal scratch']
  #allocation2 [shape = 'f32[8,8]{1,0:T(8,128)}', space=vmem, size = 0x1000, scoped, tag = 'scratch operand']
  %s0 = inlined_call_operand.vmem [shape: f32[8,8,8], index: 0, kind: input, shape index: {}]
  %s1 = inlined_call_operand.vmem [shape: f32[8,32,8], index: 1, kind: input, shape index: {}]
  %s2 = inlined_call_operand.vmem [shape: f32[64,8], index: 2, kind: input, shape index: {}]
  %s3 = inlined_call_operand.vmem [shape: f32[8,1,32], index: 3, kind: output, shape index: {}]
  %s4 = sld [smem:[#allocation0]]
  $region49: #{recurrent_gcn_evolvegcnh_forward.1} parent=0
    _
  %s6 = ssub.s32 1, %s4
  %s7 = scalar_select 0, %s6, %s4
  loop: start=0, step=1, limit=10
  $region2: #{recurrent_gcn_evolvegcnh_forward.1} parent=0 // loop_pre_header
    _
  $region3: #{recurrent_gcn_evolvegcnh_forward.1} parent=0 // loop_header
    %s9 = sphi 0, %s13
    %p10 = scmp.ge.s32.totalorder %s9, 10
    %s19 = sphi 0, %s21
    %s22 = sphi 0, %s19
    %s23 = sphi 0, %s22
    %s39 = sphi 0, %s23
    %s45 = sphi 0, %s47
    %s48 = sphi 0, %s45
    %s49 = sphi 0, %s48
    %s65 = sphi 0, %s49
    %s69 = sphi 0, %s69
    %s71 = sphi 0, %s69
    %s72 = sphi 0, %s71
    %s86 = sphi 0, %s72
    %s92 = sphi 0, %s94
    %s95 = sphi 0, %s92
    %s96 = sphi 0, %s95
    %s112 = sphi 0, %s96
  $region4: #{recurrent_gcn_evolvegcnh_forward.1} parent=0 // loop_header_branch
    %12 = sbr.rel (%p10) target = $region8
  $region5: #{recurrent_gcn_evolvegcnh_forward.1} parent=0 // loop_body
    %s14 = ssub.s32 %s9, 1
    %s15 = ssub.s32 %s9, 2
    %s16 = sadd.s32 %s9, 1
    %s17 = ssub.s32 %s9, %s16
    %p18 = scmp.eq.s32.totalorder %s17, 0
    %s20 = sadd.s32 %s19, 1
    %s21 = scalar_select %p18, %s19, %s20
    %p24 = pneg %p18
    %p25 = scmp.eq.s32.totalorder %s9, 7
    %p26 = por %p24, %p25
    %p27 = scmp.ne.s32.totalorder %s19, %s22
    %p28 = scmp.eq.s32.totalorder %s9, 0
    %p29 = por %p27, %p28
    %p30 = scmp.ne.s32.totalorder %s19, %s22
    %p31 = scmp.eq.s32.totalorder %s14, 7
    %p32 = por %p30, %p31
    %p33 = scmp.ne.s32.totalorder %s22, %s23
    %p34 = scmp.eq.s32.totalorder %s14, 0
    %p35 = por %p33, %p34
    %p36 = scmp.ne.s32.totalorder %s22, %s23
    %p37 = scmp.eq.s32.totalorder %s15, 7
    %p38 = por %p36, %p37
    %p40 = scmp.ne.s32.totalorder %s23, %s39
    %p41 = scmp.eq.s32.totalorder %s15, 0
    %p42 = por %p40, %p41
    %s43 = ssub.s32 %s9, %s16
    %p44 = scmp.eq.s32.totalorder %s43, 0
    %s46 = sadd.s32 %s45, 1
    %s47 = scalar_select %p44, %s45, %s46
    %p50 = pneg %p44
    %p51 = scmp.eq.s32.totalorder %s9, 7
    %p52 = por %p50, %p51
    %p53 = scmp.ne.s32.totalorder %s45, %s48
    %p54 = scmp.eq.s32.totalorder %s9, 0
    %p55 = por %p53, %p54
    %p56 = scmp.ne.s32.totalorder %s45, %s48
    %p57 = scmp.eq.s32.totalorder %s14, 7
    %p58 = por %p56, %p57
    %p59 = scmp.ne.s32.totalorder %s48, %s49
    %p60 = scmp.eq.s32.totalorder %s14, 0
    %p61 = por %p59, %p60
    %p62 = scmp.ne.s32.totalorder %s48, %s49
    %p63 = scmp.eq.s32.totalorder %s15, 7
    %p64 = por %p62, %p63
    %p66 = scmp.ne.s32.totalorder %s49, %s65
    %p67 = scmp.eq.s32.totalorder %s15, 0
    %p68 = por %p66, %p67
    %s70 = sadd.s32 %s69, 1
    %p73 = scmp.eq.s32.totalorder %s9, 7
    %p74 = scmp.ne.s32.totalorder %s69, %s71
    %p75 = scmp.eq.s32.totalorder %s9, 0
    %p76 = por %p74, %p75
    %p77 = scmp.ne.s32.totalorder %s69, %s71
    %p78 = scmp.eq.s32.totalorder %s14, 7
    %p79 = por %p77, %p78
    %p80 = scmp.ne.s32.totalorder %s71, %s72
    %p81 = scmp.eq.s32.totalorder %s14, 0
    %p82 = por %p80, %p81
    %p83 = scmp.ne.s32.totalorder %s71, %s72
    %p84 = scmp.eq.s32.totalorder %s15, 7
    %p85 = por %p83, %p84
    %p87 = scmp.ne.s32.totalorder %s72, %s86
    %p88 = scmp.eq.s32.totalorder %s15, 0
    %p89 = por %p87, %p88
    %s90 = ssub.s32 %s9, %s16
    %p91 = scmp.eq.s32.totalorder %s90, 0
    %s93 = sadd.s32 %s92, 1
    %s94 = scalar_select %p91, %s92, %s93
    %p97 = pneg %p91
    %p98 = scmp.eq.s32.totalorder %s9, 7
    %p99 = por %p97, %p98
    %p100 = scmp.ne.s32.totalorder %s92, %s95
    %p101 = scmp.eq.s32.totalorder %s9, 0
    %p102 = por %p100, %p101
    %p103 = scmp.ne.s32.totalorder %s92, %s95
    %p104 = scmp.eq.s32.totalorder %s14, 7
    %p105 = por %p103, %p104
    %p106 = scmp.ne.s32.totalorder %s95, %s96
    %p107 = scmp.eq.s32.totalorder %s14, 0
    %p108 = por %p106, %p107
    %p109 = scmp.ne.s32.totalorder %s95, %s96
    %p110 = scmp.eq.s32.totalorder %s15, 7
    %p111 = por %p109, %p110
    %p113 = scmp.ne.s32.totalorder %s96, %s112
    %p114 = scmp.eq.s32.totalorder %s15, 0
    %p115 = por %p113, %p114
    %p116 = scmp.le.s32.totalorder 1, %s9
    %p117 = scmp.lt.s32.totalorder %s9, 9
    %p118 = pnand %p116, %p117
    %p119 = pneg %p118
    // Predicated region
    $region9: #{recurrent_gcn_evolvegcnh_forward.1} parent=5 // pred_check
      _
    $region10: #{recurrent_gcn_evolvegcnh_forward.1} parent=5 // pred_check_branch
      %121 = sbr.rel (%p118) target = $region12
    $region11: #{recurrent_gcn_evolvegcnh_forward.1} parent=5 // pred_region
      %s122 = ssub.s32 %s9, 1
      // Predicated region
      $region13: #{recurrent_gcn_evolvegcnh_forward.1} parent=11 // pred_check
        %p123 = pneg %p82
      $region14: #{recurrent_gcn_evolvegcnh_forward.1} parent=11 // pred_check_branch
        %125 = sbr.rel (%p123) target = $region16
      $region15: #{recurrent_gcn_evolvegcnh_forward.1} parent=11 // pred_region
        _
      $region16: #{recurrent_gcn_evolvegcnh_forward.1} parent=11 // pred_fallthru
        _
    $region12: #{recurrent_gcn_evolvegcnh_forward.1} parent=5 // pred_fallthru
      _
    %p126 = scmp.lt.s32.totalorder %s9, 8
    // Predicated region
    $region17: #{recurrent_gcn_evolvegcnh_forward.1} parent=5 // pred_check
      %p127 = pneg %p126
    $region18: #{recurrent_gcn_evolvegcnh_forward.1} parent=5 // pred_check_branch
      %129 = sbr.rel (%p127) target = $region20
    $region19: #{recurrent_gcn_evolvegcnh_forward.1} parent=5 // pred_region
      // Predicated region
      $region21: #{recurrent_gcn_evolvegcnh_forward.1} parent=19 // pred_check
        %p130 = pneg %p29
      $region22: #{recurrent_gcn_evolvegcnh_forward.1} parent=19 // pred_check_branch
        %132 = sbr.rel (%p130) target = $region24
      $region23: #{recurrent_gcn_evolvegcnh_forward.1} parent=19 // pred_region
        %p133 = scmp.lt.s32.totalorder %s9, 7
        %s134 = scalar_select %p133, %s9, 7
        %s135 = smul.addr %s134, 8
        %s136 = scalar_lea.vmem %s0, %s135
      $region24: #{recurrent_gcn_evolvegcnh_forward.1} parent=19 // pred_fallthru
        _
      // Predicated region
      $region25: #{recurrent_gcn_evolvegcnh_forward.1} parent=19 // pred_check
        %p137 = pneg %p55
      $region26: #{recurrent_gcn_evolvegcnh_forward.1} parent=19 // pred_check_branch
        %139 = sbr.rel (%p137) target = $region28
      $region27: #{recurrent_gcn_evolvegcnh_forward.1} parent=19 // pred_region
        %p140 = scmp.lt.s32.totalorder %s9, 7
        %s141 = scalar_select %p140, %s9, 7
        %s142 = smul.addr %s141, 4
        %s143 = smul.addr %s142, 8
        %s144 = scalar_lea.vmem %s1, %s143
      $region28: #{recurrent_gcn_evolvegcnh_forward.1} parent=19 // pred_fallthru
        _
    $region20: #{recurrent_gcn_evolvegcnh_forward.1} parent=5 // pred_fallthru
      _
    %p145 = scmp.le.s32.totalorder 1, %s9
    %p146 = scmp.lt.s32.totalorder %s9, 9
    %p147 = pnand %p145, %p146
    %p148 = pneg %p147
    // Predicated region
    $region29: #{recurrent_gcn_evolvegcnh_forward.1} parent=5 // pred_check
      _
    $region30: #{recurrent_gcn_evolvegcnh_forward.1} parent=5 // pred_check_branch
      %150 = sbr.rel (%p147) target = $region32
    $region31: #{recurrent_gcn_evolvegcnh_forward.1} parent=5 // pred_region
      %s151 = ssub.s32 %s9, 1
      %p152 = scmp.lt.s32.totalorder %s14, 7
      %s153 = scalar_select %p152, %s14, 7
      %s154 = smul.addr %s153, 8
      %s155 = scalar_lea.vmem %s0, %s154
      %p156 = pneg %p35
      %p157 = pneg %p32
      %p158 = scmp.lt.s32.totalorder %s14, 7
      %s159 = scalar_select %p158, %s14, 7
      %s160 = smul.addr %s159, 4
      %s161 = smul.addr %s160, 8
      %s162 = scalar_lea.vmem %s1, %s161
      %p163 = pneg %p61
      %p164 = pneg %p58
      %p165 = pneg %p82
      %p166 = pneg %p79
      %p167 = pneg %p108
      %p168 = pneg %p105
      %p169 = scmp.lt.s32.totalorder %s14, 7
      %s170 = scalar_select %p169, %s14, 7
      %s171 = scalar_lea.vmem %s3, %s170
      %p172 = scmp.lt.s32.totalorder %s14, 7
      %s173 = scalar_select %p172, %s14, 7
      %s174 = smul.addr %s173, 8
      %s175 = scalar_lea.vmem %s0, %s174
      %p176 = scmp.lt.s32.totalorder %s14, 7
      %s177 = scalar_select %p176, %s14, 7
      %s178 = smul.addr %s177, 4
      %s179 = smul.addr %s178, 8
      %s180 = scalar_lea.vmem %s1, %s179
      %p181 = scmp.lt.s32.totalorder %s14, 7
      %s182 = scalar_select %p181, %s14, 7
      %s183 = scalar_lea.vmem %s3, %s182
      %p184 = scmp.eq.s32.totalorder %s14, 0
      // Predicated region
      $region33: #{recurrent_gcn_evolvegcnh_forward.1} parent=31 // pred_check
        %p185 = pneg %p184
      $region34: #{recurrent_gcn_evolvegcnh_forward.1} parent=31 // pred_check_branch
        %187 = sbr.rel (%p185) target = $region36
      $region35: #{recurrent_gcn_evolvegcnh_forward.1} parent=31 // pred_region
        %v188 = vld [vmem:[%s2 + $0x30] sm:$0xff]
        %vm189 = vcmask 64512
        %190 = vst.msk [vmem:[#allocation2] sm:$0xff] %vm189, %v188
      $region36: #{recurrent_gcn_evolvegcnh_forward.1} parent=31 // pred_fallthru
        _
      %v191 = vld [vmem:[%s175] sm:$0xff]
      %v192 = vld [vmem:[#allocation2] sm:$0xff]
      %v193 = vld [vmem:[%s2] sm:$0xff]
      %v194 = vld [vmem:[%s2 + $0x8] sm:$0xff]
      %v195 = vld [vmem:[%s2 + $0x10] sm:$0xff]
      %v196 = vld [vmem:[%s2 + $0x18] sm:$0xff]
      %vm197 = vcmask 64512
      %v199 = vsel %vm197, %v192, 0
      %201 = vmatpush.msra.mxu0 0.0
      %202 = vmatpush.msra.mxu0 0.0
      %203 = vmatpush.msra.mxu0 0.0
      %204 = vmatpush.msra.mxu0 0.0
      %205 = vmatpush.msra.mxu0 0.0
      %206 = vmatpush.msra.mxu0 0.0
      %207 = vmatpush.msra.mxu0 0.0
      %208 = vmatpush.msra.mxu0 0.0
      %209 = vmatpush.msra.mxu0 0.0
      %210 = vmatpush.msra.mxu0 0.0
      %211 = vmatpush.msra.mxu0 0.0
      %212 = vmatpush.msra.mxu0 0.0
      %213 = vmatpush.msra.mxu0 0.0
      %214 = vmatpush.msra.mxu0 0.0
      %215 = vmatpush.msra.mxu0 0.0
      %216 = vmatpush.msra.mxu0 %v196
      %217 = vmatmul.f32.gmra.mxu0 %v199
      %v218 = vpop.f32.mrf.mxu0
      %v219 = vadd.f32 0.0, %v218
      %220 = vdwg.mxu0
      %v221 = vld [vmem:[%s2 + $0x20] sm:$0xff]
      %222 = vmatpush.msra.mxu0 0.0
      %223 = vmatpush.msra.mxu0 0.0
      %224 = vmatpush.msra.mxu0 0.0
      %225 = vmatpush.msra.mxu0 0.0
      %226 = vmatpush.msra.mxu0 0.0
      %227 = vmatpush.msra.mxu0 0.0
      %228 = vmatpush.msra.mxu0 0.0
      %229 = vmatpush.msra.mxu0 0.0
      %230 = vmatpush.msra.mxu0 0.0
      %231 = vmatpush.msra.mxu0 0.0
      %232 = vmatpush.msra.mxu0 0.0
      %233 = vmatpush.msra.mxu0 0.0
      %234 = vmatpush.msra.mxu0 0.0
      %235 = vmatpush.msra.mxu0 0.0
      %236 = vmatpush.msra.mxu0 0.0
      %237 = vmatpush.msra.mxu0 %v221
      %238 = vmatmul.f32.gmra.mxu0 %v199
      %v239 = vpop.f32.mrf.mxu0
      %v240 = vadd.f32 0.0, %v239
      %241 = vdwg.mxu0
      %v242 = vld [vmem:[%s2 + $0x28] sm:$0xff]
      %v243 = vld [vmem:[%s2 + $0x38] sm:$0x1]
      %v244 = vld [vmem:[%s2 + $0x39] sm:$0x1]
      %v245 = vld [vmem:[%s2 + $0x3a] sm:$0x1]
      %v246 = vld [vmem:[%s2 + $0x3b] sm:$0x1]
      %v247 = vld [vmem:[%s2 + $0x3c] sm:$0x1]
      %v249 = vsel %vm197, %v191, 0
      %251 = vmatpush.msra.mxu0 0.0
      %252 = vmatpush.msra.mxu0 0.0
      %253 = vmatpush.msra.mxu0 0.0
      %254 = vmatpush.msra.mxu0 0.0
      %255 = vmatpush.msra.mxu0 0.0
      %256 = vmatpush.msra.mxu0 0.0
      %257 = vmatpush.msra.mxu0 0.0
      %258 = vmatpush.msra.mxu0 0.0
      %259 = vmatpush.msra.mxu0 0.0
      %260 = vmatpush.msra.mxu0 0.0
      %261 = vmatpush.msra.mxu0 0.0
      %262 = vmatpush.msra.mxu0 0.0
      %263 = vmatpush.msra.mxu0 0.0
      %264 = vmatpush.msra.mxu0 0.0
      %265 = vmatpush.msra.mxu0 0.0
      %266 = vmatpush.msra.mxu0 %v193
      %267 = vmatmul.f32.gmra.mxu0 %v249
      %v268 = vpop.f32.mrf.mxu0
      %v269 = vadd.f32 %v219, %v268
      %270 = vdwg.mxu0
      %v271 = vperm.slane %v243, 0
      %v272 = vadd.f32 %v269, %v271
      %v273 = vxor.u32 %v272, 2147483648
      %v274 = vmul.f32 %v273, 1.442695
      %v275 = vpow.pop %v274
      %v276 = vadd.f32 %v275, 1.0
      %v277 = vrcp.pop %v276
      %v278 = vmul.f32 %v276, %v277
      %v279 = vsub.f32 1.0, %v278
      %v280 = vmul.f32 %v277, %v279
      %v281 = vadd.f32 %v277, %v280
      %vm282 = vweird.f32 %v276
      %vm283 = vweird.f32 %v277
      %vm284 = vmor %vm282, %vm283
      %v285 = vsel %vm284, %v277, %v281
      %v286 = vand.u32 2147483647, %v276
      %vm287 = vcmp.eq.f32.partialorder %v286, 8.507059e+37
      %v288 = vand.u32 %v276, 2147483648
      %v289 = vor.u32 1.1754944e-38, %v288
      %v290 = vsel %vm287, %v289, %v285
      %v291 = vmul.f32 1.0, %v290
      %292 = vmatpush.msra.mxu0 0.0
      %293 = vmatpush.msra.mxu0 0.0
      %294 = vmatpush.msra.mxu0 0.0
      %295 = vmatpush.msra.mxu0 0.0
      %296 = vmatpush.msra.mxu0 0.0
      %297 = vmatpush.msra.mxu0 0.0
      %298 = vmatpush.msra.mxu0 0.0
      %299 = vmatpush.msra.mxu0 0.0
      %300 = vmatpush.msra.mxu0 0.0
      %301 = vmatpush.msra.mxu0 0.0
      %302 = vmatpush.msra.mxu0 0.0
      %303 = vmatpush.msra.mxu0 0.0
      %304 = vmatpush.msra.mxu0 0.0
      %305 = vmatpush.msra.mxu0 0.0
      %306 = vmatpush.msra.mxu0 0.0
      %307 = vmatpush.msra.mxu0 %v194
      %308 = vmatmul.f32.gmra.mxu0 %v249
      %v309 = vpop.f32.mrf.mxu0
      %v310 = vadd.f32 %v240, %v309
      %311 = vdwg.mxu0
      %v312 = vperm.slane %v244, 0
      %v313 = vadd.f32 %v310, %v312
      %v314 = vxor.u32 %v313, 2147483648
      %v315 = vmul.f32 %v314, 1.442695
      %v316 = vpow.pop %v315
      %v317 = vadd.f32 %v316, 1.0
      %v318 = vrcp.pop %v317
      %v319 = vmul.f32 %v317, %v318
      %v320 = vsub.f32 1.0, %v319
      %v321 = vmul.f32 %v318, %v320
      %v322 = vadd.f32 %v318, %v321
      %vm323 = vweird.f32 %v317
      %vm324 = vweird.f32 %v318
      %vm325 = vmor %vm323, %vm324
      %v326 = vsel %vm325, %v318, %v322
      %v327 = vand.u32 2147483647, %v317
      %vm328 = vcmp.eq.f32.partialorder %v327, 8.507059e+37
      %v329 = vand.u32 %v317, 2147483648
      %v330 = vor.u32 1.1754944e-38, %v329
      %v331 = vsel %vm328, %v330, %v326
      %v332 = vmul.f32 1.0, %v331
      %v333 = vperm.slane %v245, 0
      %334 = vmatpush.msra.mxu0 0.0
      %335 = vmatpush.msra.mxu0 0.0
      %336 = vmatpush.msra.mxu0 0.0
      %337 = vmatpush.msra.mxu0 0.0
      %338 = vmatpush.msra.mxu0 0.0
      %339 = vmatpush.msra.mxu0 0.0
      %340 = vmatpush.msra.mxu0 0.0
      %341 = vmatpush.msra.mxu0 0.0
      %342 = vmatpush.msra.mxu0 0.0
      %343 = vmatpush.msra.mxu0 0.0
      %344 = vmatpush.msra.mxu0 0.0
      %345 = vmatpush.msra.mxu0 0.0
      %346 = vmatpush.msra.mxu0 0.0
      %347 = vmatpush.msra.mxu0 0.0
      %348 = vmatpush.msra.mxu0 0.0
      %349 = vmatpush.msra.mxu0 %v195
      %350 = vmatmul.f32.gmra.mxu0 %v249
      %v351 = vpop.f32.mrf.mxu0
      %v352 = vadd.f32 %v333, %v351
      %353 = vdwg.mxu0
      %v354 = vperm.slane %v246, 0
      %355 = vmatpush.msra.mxu0 0.0
      %356 = vmatpush.msra.mxu0 0.0
      %357 = vmatpush.msra.mxu0 0.0
      %358 = vmatpush.msra.mxu0 0.0
      %359 = vmatpush.msra.mxu0 0.0
      %360 = vmatpush.msra.mxu0 0.0
      %361 = vmatpush.msra.mxu0 0.0
      %362 = vmatpush.msra.mxu0 0.0
      %363 = vmatpush.msra.mxu0 0.0
      %364 = vmatpush.msra.mxu0 0.0
      %365 = vmatpush.msra.mxu0 0.0
      %366 = vmatpush.msra.mxu0 0.0
      %367 = vmatpush.msra.mxu0 0.0
      %368 = vmatpush.msra.mxu0 0.0
      %369 = vmatpush.msra.mxu0 0.0
      %370 = vmatpush.msra.mxu0 %v242
      %371 = vmatmul.f32.gmra.mxu0 %v199
      %v372 = vpop.f32.mrf.mxu0
      %v373 = vadd.f32 %v354, %v372
      %374 = vdwg.mxu0
      %v375 = vmul.f32 %v291, %v373
      %v376 = vadd.f32 %v352, %v375
      %v377 = vtanh.pop %v376
      %v378 = vsub.f32 1.0, %v332
      %v379 = vmul.f32 %v378, %v377
      %v380 = vmul.f32 %v332, %v192
      %v381 = vadd.f32 %v379, %v380
      %382 = vst.msk [vmem:[#allocation2] sm:$0xff] %vm197, %v381
      %v383 = vld [vmem:[%s180] sm:$0xff]
      %v384 = vld [vmem:[%s180 + $0x8] sm:$0xff]
      %v385 = vld [vmem:[%s180 + $0x10] sm:$0xff]
      %v386 = vld [vmem:[%s180 + $0x18] sm:$0xff]
      %v388 = vsel %vm197, %v383, 0
      %v391 = vsel %vm197, %v384, 0
      %v394 = vsel %vm197, %v385, 0
      %v397 = vsel %vm197, %v386, 0
      %399 = vmatpush.msra.mxu0 0.0
      %400 = vmatpush.msra.mxu0 0.0
      %401 = vmatpush.msra.mxu0 0.0
      %402 = vmatpush.msra.mxu0 0.0
      %403 = vmatpush.msra.mxu0 0.0
      %404 = vmatpush.msra.mxu0 0.0
      %405 = vmatpush.msra.mxu0 0.0
      %406 = vmatpush.msra.mxu0 0.0
      %407 = vmatpush.msra.mxu0 0.0
      %408 = vmatpush.msra.mxu0 0.0
      %409 = vmatpush.msra.mxu0 0.0
      %410 = vmatpush.msra.mxu0 0.0
      %411 = vmatpush.msra.mxu0 0.0
      %412 = vmatpush.msra.mxu0 0.0
      %413 = vmatpush.msra.mxu0 0.0
      %414 = vmatpush.msra.mxu0 %v381
      %415 = vmatmul.f32.gmra.mxu0 %v388
      %v416 = vpop.f32.mrf.mxu0
      %v417 = vadd.f32 0.0, %v416
      %418 = vmatmul.f32.gmra.mxu0 %v391
      %v419 = vpop.f32.mrf.mxu0
      %v420 = vadd.f32 0.0, %v419
      %421 = vmatmul.f32.gmra.mxu0 %v394
      %v422 = vpop.f32.mrf.mxu0
      %v423 = vadd.f32 0.0, %v422
      %424 = vmatmul.f32.gmra.mxu0 %v397
      %v425 = vpop.f32.mrf.mxu0
      %v426 = vadd.f32 0.0, %v425
      %427 = vdwg.mxu0
      %v428 = vmax.f32 %v417, 0.0
      %v429 = vmax.f32 %v420, 0.0
      %v430 = vmax.f32 %v423, 0.0
      %v431 = vmax.f32 %v426, 0.0
      %v433 = vsel %vm197, %v247, 0
      %v436 = vsel %vm197, %v428, 0
      %v439 = vsel %vm197, %v429, 0
      %v442 = vsel %vm197, %v430, 0
      %v445 = vsel %vm197, %v431, 0
      %447 = vmatpush.xpose.msra.mxu0 0.0
      %448 = vmatpush.xpose.msra.mxu0 0.0
      %449 = vmatpush.xpose.msra.mxu0 0.0
      %450 = vmatpush.xpose.msra.mxu0 0.0
      %451 = vmatpush.xpose.msra.mxu0 0.0
      %452 = vmatpush.xpose.msra.mxu0 0.0
      %453 = vmatpush.xpose.msra.mxu0 0.0
      %454 = vmatpush.xpose.msra.mxu0 0.0
      %455 = vmatpush.xpose.msra.mxu0 0.0
      %456 = vmatpush.xpose.msra.mxu0 0.0
      %457 = vmatpush.xpose.msra.mxu0 0.0
      %458 = vmatpush.xpose.msra.mxu0 0.0
      %459 = vmatpush.xpose.msra.mxu0 %v445
      %460 = vmatpush.xpose.msra.mxu0 %v442
      %461 = vmatpush.xpose.msra.mxu0 %v439
      %462 = vmatpush.xpose.msra.mxu0 %v436
      %463 = vmatmul.f32.gmra.mxu0 %v433
      %v464 = vpop.f32.mrf.mxu0
      %v465 = vadd.f32 0.0, %v464
      %466 = vdwg.mxu0
      %vm467 = vcmask 253952
      %468 = vst.msk [vmem:[%s183] sm:$0x1] %vm467, %v465
      %p469 = scmp.lt.s32.totalorder %s14, 7
      %s470 = scalar_select %p469, %s14, 7
      %s471 = scalar_lea.vmem %s3, %s470
      // Predicated region
      $region37: #{recurrent_gcn_evolvegcnh_forward.1} parent=31 // pred_check
        %p472 = pneg %p105
      $region38: #{recurrent_gcn_evolvegcnh_forward.1} parent=31 // pred_check_branch
        %474 = sbr.rel (%p472) target = $region40
      $region39: #{recurrent_gcn_evolvegcnh_forward.1} parent=31 // pred_region
        _
      $region40: #{recurrent_gcn_evolvegcnh_forward.1} parent=31 // pred_fallthru
        _
    $region32: #{recurrent_gcn_evolvegcnh_forward.1} parent=5 // pred_fallthru
      _
    %p475 = scmp.le.s32.totalorder 2, %s9
    // Predicated region
    $region41: #{recurrent_gcn_evolvegcnh_forward.1} parent=5 // pred_check
      %p476 = pneg %p475
    $region42: #{recurrent_gcn_evolvegcnh_forward.1} parent=5 // pred_check_branch
      %478 = sbr.rel (%p476) target = $region44
    $region43: #{recurrent_gcn_evolvegcnh_forward.1} parent=5 // pred_region
      %s479 = ssub.s32 %s9, 2
      // Predicated region
      $region45: #{recurrent_gcn_evolvegcnh_forward.1} parent=43 // pred_check
        %p480 = pneg %p111
      $region46: #{recurrent_gcn_evolvegcnh_forward.1} parent=43 // pred_check_branch
        %482 = sbr.rel (%p480) target = $region48
      $region47: #{recurrent_gcn_evolvegcnh_forward.1} parent=43 // pred_region
        %p483 = scmp.lt.s32.totalorder %s15, 7
        %s484 = scalar_select %p483, %s15, 7
        %s485 = scalar_lea.vmem %s3, %s484
      $region48: #{recurrent_gcn_evolvegcnh_forward.1} parent=43 // pred_fallthru
        _
    $region44: #{recurrent_gcn_evolvegcnh_forward.1} parent=5 // pred_fallthru
      _
  $region6: #{recurrent_gcn_evolvegcnh_forward.1} parent=0 // loop_footer
    %s13 = sadd.s32 1, %s9
  $region7: #{recurrent_gcn_evolvegcnh_forward.1} parent=0 // loop_footer_branch
    %8 = sbr.rel target = $region3
  $region8: #{recurrent_gcn_evolvegcnh_forward.1} parent=0 // loop_exit
    _

</llo_original>
